<compile_context>
chip_gen: v7x
topology: tpu7x:2x2x1
jax: 0.10.0
libtpu: 0.0.40
codegen_flags: <defaults>
</compile_context>

<pallas_src>
import functools

import jax
import jax.numpy as jnp
from jax.experimental import pallas as pl
from jax.experimental.pallas import tpu as pltpu


def _cdiv(a, b):
    return (a + b - 1) // b


def _round_up(x, m):
    return ((x + m - 1) // m) * m


def _is_v7x():
    try:
        kind = jax.devices()[0].device_kind.lower()
    except Exception:
        return False
    return ("v7" in kind) or ("7x" in kind)


def _barlow_moments_kernel(z1_ref, z2_ref, c_ref, mom_ref, *,
                           n_true, tn, steps_per_split):
    """Accumulates raw cross moments for one batch split.

    Outputs (resident across the inner "arbitrary" axis):
      c_ref   (1, D, D): sum_b z1[b, :]^T z2[b, :]
      mom_ref (1, 4, D): rows = [sum z1, sum z2, sum z1^2, sum z2^2]
    """
    split = pl.program_id(0)
    k = pl.program_id(1)

    @pl.when(k == 0)
    def _init():
        c_ref[...] = jnp.zeros_like(c_ref)
        mom_ref[...] = jnp.zeros_like(mom_ref)

    # Ragged / overflow tile masking (the wrapper never pads inputs in HBM).
    tile = split * steps_per_split + k                 # un-clamped tile index
    row0 = tile * tn
    row_ids = row0 + jax.lax.broadcasted_iota(jnp.int32, (tn, 1), 0)
    valid = row_ids < n_true                           # (tn, 1)

    zero = jnp.zeros((), dtype=z1_ref.dtype)
    z1_in = jnp.where(valid, z1_ref[...], zero)        # (tn, D) native dtype
    z2_in = jnp.where(valid, z2_ref[...], zero)

    # Raw cross second moment on the MXU (native dtype, f32 accumulation).
    # The LHS is contracted over dim 0; at small D the implied transpose hides
    # under DMA since the kernel is memory-bound.
    c_ref[...] += jnp.expand_dims(
        jax.lax.dot_general(
            z1_in, z2_in,
            dimension_numbers=(((0,), (0,)), ((), ())),
            preferred_element_type=jnp.float32),
        0)

    # Per-feature first / second raw moments (f32).
    z1 = z1_in.astype(jnp.float32)
    z2 = z2_in.astype(jnp.float32)
    s1 = jnp.sum(z1, axis=0, keepdims=True)
    s2 = jnp.sum(z2, axis=0, keepdims=True)
    q1 = jnp.sum(z1 * z1, axis=0, keepdims=True)
    q2 = jnp.sum(z2 * z2, axis=0, keepdims=True)
    mom_ref[...] += jnp.expand_dims(
        jnp.concatenate([s1, s2, q1, q2], axis=0), 0)


def _finalize(c_parts, mom_parts, n):
    """Tiny O(D^2) BatchNorm + Barlow loss epilogue (plain XLA)."""
    eps = jnp.float32(1e-5)
    inv_n = jnp.float32(1.0 / n)
    c_raw = jnp.sum(c_parts, axis=0)                   # (D, D)
    mom = jnp.sum(mom_parts, axis=0)                   # (4, D)
    s1, s2, q1, q2 = mom[0], mom[1], mom[2], mom[3]
    m1 = s1 * inv_n
    m2 = s2 * inv_n
    # Raw-moment variance can go slightly negative from cancellation -> clamp.
    v1 = jnp.maximum(q1 * inv_n - m1 * m1, 0.0)
    v2 = jnp.maximum(q2 * inv_n - m2 * m2, 0.0)
    scale1 = jax.lax.rsqrt(v1 + eps) * inv_n           # fold 1/N into left scale
    scale2 = jax.lax.rsqrt(v2 + eps)
    c = (c_raw - jnp.outer(m1, s2)) * jnp.outer(scale1, scale2)
    diag = jnp.diagonal(c)
    on = jnp.sum((diag - 1.0) ** 2)
    off = jnp.sum(c * c) - jnp.sum(diag * diag)
    return on, off


def barlow_loss(z1, z2, *, block_n=4096, n_splits=None):
    """Barlow Twins loss. z1, z2: (N, D) arrays. Returns (on_diag, off_diag)."""
    N, D = z1.shape
    assert z2.shape == (N, D)

    if n_splits is None:
        # v7x has 2 TensorCores per chip, each with its own HBM path.
        n_splits = 2 if _is_v7x() else 1

    # Batch tile: big (amortizes per-step pipeline overhead), multiple of 8,
    # or the full (possibly unaligned) batch when it fits in one block.
    tn = _round_up(min(block_n, N), 8)
    if tn >= N:
        tn = N                                   # single full-extent block
    tiles_total = _cdiv(N, tn)
    n_splits = max(1, min(n_splits, tiles_total))
    steps = _cdiv(tiles_total, n_splits)
    grid = (n_splits, steps)

    kernel = functools.partial(
        _barlow_moments_kernel, n_true=N, tn=tn, steps_per_split=steps)

    itemsize = jnp.dtype(z1.dtype).itemsize
    last_tile = tiles_total - 1

    def in_index(c, k):
        # Overflow tiles (only in the last split) clamp to the final tile; the
        # kernel masks every row of those tiles so they contribute nothing.
        return (jnp.minimum(c * steps + k, last_tile), 0)

    def out_index(c, k):
        return (c, 0, 0)

    # VMEM footprint: 2 inputs x 2 pipeline buffers + double-buffered outputs.
    in_bytes = 2 * 2 * tn * D * itemsize
    out_bytes = 2 * (D * D + 4 * D) * 4
    vmem_cap = (56 << 20) if _is_v7x() else (100 << 20)
    vmem_limit = int(min(max(in_bytes + out_bytes + (4 << 20), 16 << 20),
                         vmem_cap))

    c_parts, mom_parts = pl.pallas_call(
        kernel,
        out_shape=(
            jax.ShapeDtypeStruct((n_splits, D, D), jnp.float32),
            jax.ShapeDtypeStruct((n_splits, 4, D), jnp.float32),
        ),
        grid=grid,
        in_specs=[
            pl.BlockSpec((tn, D), in_index),
            pl.BlockSpec((tn, D), in_index),
        ],
        out_specs=(
            pl.BlockSpec((1, D, D), out_index),
            pl.BlockSpec((1, 4, D), out_index),
        ),
        compiler_params=pltpu.CompilerParams(
            dimension_semantics=("parallel", "arbitrary"),
            vmem_limit_bytes=vmem_limit,
        ),
        cost_estimate=pl.CostEstimate(
            flops=2 * N * D * D + 6 * N * D,
            transcendentals=0,
            bytes_accessed=2 * N * D * itemsize + n_splits * (D * D + 4 * D) * 4,
        ),
    )(z1, z2)

    return _finalize(c_parts, mom_parts, N)


def _barlow_loss_ref(z1, z2):
    eps = 1e-5

    def bn(z):
        m = jnp.mean(z, axis=0, keepdims=True)
        v = jnp.mean((z - m) ** 2, axis=0, keepdims=True)
        return (z - m) / jnp.sqrt(v + eps)

    c = bn(z1).T @ bn(z2) / z1.shape[0]
    on = jnp.sum((jnp.diag(c) - 1.0) ** 2)
    off = jnp.sum(c ** 2) - jnp.sum(jnp.diag(c) ** 2)
    return on, off


if __name__ == "__main__":
    # out_dim = 128 (module default); small batch that is NOT tile-aligned so
    # both the streaming accumulation and the ragged-tile masking are covered.
    N, D = 20, 128
    key = jax.random.PRNGKey(0)
    k1, k2 = jax.random.split(key)
    z1 = jax.random.normal(k1, (N, D), dtype=jnp.float32)
    z2 = jax.random.normal(k2, (N, D), dtype=jnp.float32)

    on_ref, off_ref = _barlow_loss_ref(z1, z2)

    # 1) Default config: one large tile, split count auto-detected per chip.
    on, off = jax.block_until_ready(barlow_loss(z1, z2))
    assert jnp.allclose(on, on_ref, rtol=1e-4, atol=1e-4), (on, on_ref)
    assert jnp.allclose(off, off_ref, rtol=1e-4, atol=1e-4), (off, off_ref)

    # 2) Tiny tiles + 2 batch splits: exercises streaming accumulation, the
    #    ragged last tile, and the overflow-tile clamp/mask path.
    on2, off2 = jax.block_until_ready(barlow_loss(z1, z2, block_n=8, n_splits=2))
    assert jnp.allclose(on2, on_ref, rtol=1e-4, atol=1e-4), (on2, on_ref)
    assert jnp.allclose(off2, off_ref, rtol=1e-4, atol=1e-4), (off2, off_ref)

    print("KERNEL_OK")
</pallas_src>

<mosaic_0001>
module attributes {stable_mosaic.version = 11 : i64} {
  func.func @_barlow_moments_kernel(%arg0: i32, %arg1: i32, %arg2: memref<20x128xf32, #tpu.memory_space<vmem>>, %arg3: memref<20x128xf32, #tpu.memory_space<vmem>>, %arg4: memref<1x128x128xf32, #tpu.memory_space<vmem>>, %arg5: memref<1x4x128xf32, #tpu.memory_space<vmem>>) attributes {dimension_semantics = [#tpu.dimension_semantics<parallel>, #tpu.dimension_semantics<arbitrary>], iteration_bounds = array<i64: 1, 1>, scalar_prefetch = 0 : i64, scratch_operands = 0 : i64, tpu.core_type = #tpu.core_type<tc>, window_params = [{transform_indices = @transform_0, window_bounds = array<i64: 20, 128>}, {transform_indices = @transform_1, window_bounds = array<i64: 20, 128>}, {transform_indices = @transform_2, window_bounds = array<i64: 1, 128, 128>}, {transform_indices = @transform_3, window_bounds = array<i64: 1, 4, 128>}]} {
    %c0_i32 = arith.constant 0 : i32
    %0 = arith.cmpi eq, %arg1, %c0_i32 : i32
    %1 = arith.extui %0 : i1 to i32
    %c0_i32_0 = arith.constant 0 : i32
    %2 = arith.cmpi ne, %1, %c0_i32_0 : i32
    scf.if %2 {
      %cst_23 = arith.constant 0.000000e+00 : f32
      %41 = vector.broadcast %cst_23 : f32 to vector<1x128x128xf32>
      %c0_24 = arith.constant 0 : index
      %c0_25 = arith.constant 0 : index
      %c0_26 = arith.constant 0 : index
      %42 = vector.load %arg4[%c0_24, %c0_25, %c0_26] : memref<1x128x128xf32, #tpu.memory_space<vmem>>, vector<1x128x128xf32>
      tpu.vector_store %arg4[%c0_24, %c0_25, %c0_26], %41 {strides = array<i32>} : memref<1x128x128xf32, #tpu.memory_space<vmem>>, vector<1x128x128xf32>,
      %cst_27 = arith.constant 0.000000e+00 : f32
      %43 = vector.broadcast %cst_27 : f32 to vector<1x4x128xf32>
      %c0_28 = arith.constant 0 : index
      %c0_29 = arith.constant 0 : index
      %c0_30 = arith.constant 0 : index
      %44 = vector.load %arg5[%c0_28, %c0_29, %c0_30] : memref<1x4x128xf32, #tpu.memory_space<vmem>>, vector<1x4x128xf32>
      tpu.vector_store %arg5[%c0_28, %c0_29, %c0_30], %43 {strides = array<i32>} : memref<1x4x128xf32, #tpu.memory_space<vmem>>, vector<1x4x128xf32>,
    } else {
    }
    %c1_i32 = arith.constant 1 : i32
    %3 = arith.muli %arg0, %c1_i32 : i32
    %4 = arith.addi %3, %arg1 : i32
    %c20_i32 = arith.constant 20 : i32
    %5 = arith.muli %4, %c20_i32 : i32
    %6 = tpu.iota {dimensions = array<i32: 0>} : vector<20x1xi32>
    %7 = vector.broadcast %5 : i32 to vector<20x1xi32>
    %8 = arith.addi %7, %6 : vector<20x1xi32>
    %c20_i32_1 = arith.constant 20 : i32
    %9 = vector.broadcast %c20_i32_1 : i32 to vector<20x1xi32>
    %10 = arith.cmpi slt, %8, %9 : vector<20x1xi32>
    %c0 = arith.constant 0 : index
    %c0_2 = arith.constant 0 : index
    %11 = vector.load %arg2[%c0, %c0_2] : memref<20x128xf32, #tpu.memory_space<vmem>>, vector<20x128xf32>
    %cst = arith.constant 0.000000e+00 : f32
    %12 = vector.shape_cast %10 : vector<20x1xi1> to vector<20x1xi1>
    %13 = vector.broadcast %12 : vector<20x1xi1> to vector<20x128xi1>
    %14 = vector.broadcast %cst : f32 to vector<20x128xf32>
    %15 = arith.select %13, %11, %14 : vector<20x128xi1>, vector<20x128xf32>
    %c0_3 = arith.constant 0 : index
    %c0_4 = arith.constant 0 : index
    %16 = vector.load %arg3[%c0_3, %c0_4] : memref<20x128xf32, #tpu.memory_space<vmem>>, vector<20x128xf32>
    %cst_5 = arith.constant 0.000000e+00 : f32
    %17 = vector.shape_cast %10 : vector<20x1xi1> to vector<20x1xi1>
    %18 = vector.broadcast %17 : vector<20x1xi1> to vector<20x128xi1>
    %19 = vector.broadcast %cst_5 : f32 to vector<20x128xf32>
    %20 = arith.select %18, %16, %19 : vector<20x128xi1>, vector<20x128xf32>
    %c0_6 = arith.constant 0 : index
    %c0_7 = arith.constant 0 : index
    %c0_8 = arith.constant 0 : index
    %21 = vector.load %arg4[%c0_6, %c0_7, %c0_8] : memref<1x128x128xf32, #tpu.memory_space<vmem>>, vector<1x128x128xf32>
    %cst_9 = arith.constant dense<0.000000e+00> : vector<128x128xf32>
    %22 = tpu.matmul %15, %20, %cst_9 {dimension_numbers = #tpu.dot_dimension_numbers<[0], [0], [1], [1], [0, 1, 1, 1], [], []>} : vector<20x128xf32>, vector<20x128xf32>, vector<128x128xf32> -> vector<128x128xf32>
    %23 = vector.shape_cast %22 : vector<128x128xf32> to vector<1x128x128xf32>
    %24 = arith.addf %21, %23 : vector<1x128x128xf32>
    %c0_10 = arith.constant 0 : index
    %c0_11 = arith.constant 0 : index
    %c0_12 = arith.constant 0 : index
    %25 = vector.load %arg4[%c0_10, %c0_11, %c0_12] : memref<1x128x128xf32, #tpu.memory_space<vmem>>, vector<1x128x128xf32>
    tpu.vector_store %arg4[%c0_10, %c0_11, %c0_12], %24 {strides = array<i32>} : memref<1x128x128xf32, #tpu.memory_space<vmem>>, vector<1x128x128xf32>,
    %cst_13 = arith.constant dense<0.000000e+00> : vector<128xf32>
    %26 = vector.multi_reduction <add>, %15, %cst_13 [0] : vector<20x128xf32> to vector<128xf32>
    %27 = vector.shape_cast %26 : vector<128xf32> to vector<1x128xf32>
    %cst_14 = arith.constant dense<0.000000e+00> : vector<128xf32>
    %28 = vector.multi_reduction <add>, %20, %cst_14 [0] : vector<20x128xf32> to vector<128xf32>
    %29 = vector.shape_cast %28 : vector<128xf32> to vector<1x128xf32>
    %30 = arith.mulf %15, %15 : vector<20x128xf32>
    %cst_15 = arith.constant dense<0.000000e+00> : vector<128xf32>
    %31 = vector.multi_reduction <add>, %30, %cst_15 [0] : vector<20x128xf32> to vector<128xf32>
    %32 = vector.shape_cast %31 : vector<128xf32> to vector<1x128xf32>
    %33 = arith.mulf %20, %20 : vector<20x128xf32>
    %cst_16 = arith.constant dense<0.000000e+00> : vector<128xf32>
    %34 = vector.multi_reduction <add>, %33, %cst_16 [0] : vector<20x128xf32> to vector<128xf32>
    %35 = vector.shape_cast %34 : vector<128xf32> to vector<1x128xf32>
    %c0_17 = arith.constant 0 : index
    %c0_18 = arith.constant 0 : index
    %c0_19 = arith.constant 0 : index
    %36 = vector.load %arg5[%c0_17, %c0_18, %c0_19] : memref<1x4x128xf32, #tpu.memory_space<vmem>>, vector<1x4x128xf32>
    %37 = tpu.concatenate %27, %29, %32, %35 in 0 : vector<1x128xf32>, vector<1x128xf32>, vector<1x128xf32>, vector<1x128xf32> -> vector<4x128xf32>
    %38 = vector.shape_cast %37 : vector<4x128xf32> to vector<1x4x128xf32>
    %39 = arith.addf %36, %38 : vector<1x4x128xf32>
    %c0_20 = arith.constant 0 : index
    %c0_21 = arith.constant 0 : index
    %c0_22 = arith.constant 0 : index
    %40 = vector.load %arg5[%c0_20, %c0_21, %c0_22] : memref<1x4x128xf32, #tpu.memory_space<vmem>>, vector<1x4x128xf32>
    tpu.vector_store %arg5[%c0_20, %c0_21, %c0_22], %39 {strides = array<i32>} : memref<1x4x128xf32, #tpu.memory_space<vmem>>, vector<1x4x128xf32>,
    return
  }
  func.func @transform_0(%arg0: i32, %arg1: i32) -> (i32, i32) {
    %c1_i32 = arith.constant 1 : i32
    %0 = arith.muli %arg0, %c1_i32 : i32
    %1 = arith.addi %0, %arg1 : i32
    %c0_i32 = arith.constant 0 : i32
    %2 = arith.minsi %1, %c0_i32 : i32
    %c0_i32_0 = arith.constant 0 : i32
    %c0_i32_1 = arith.constant 0 : i32
    return %2, %c0_i32_0 : i32, i32
  }
  func.func @transform_1(%arg0: i32, %arg1: i32) -> (i32, i32) {
    %c1_i32 = arith.constant 1 : i32
    %0 = arith.muli %arg0, %c1_i32 : i32
    %1 = arith.addi %0, %arg1 : i32
    %c0_i32 = arith.constant 0 : i32
    %2 = arith.minsi %1, %c0_i32 : i32
    %c0_i32_0 = arith.constant 0 : i32
    %c0_i32_1 = arith.constant 0 : i32
    return %2, %c0_i32_0 : i32, i32
  }
  func.func @transform_2(%arg0: i32, %arg1: i32) -> (i32, i32, i32) {
    %c0_i32 = arith.constant 0 : i32
    %c0_i32_0 = arith.constant 0 : i32
    %c0_i32_1 = arith.constant 0 : i32
    return %arg0, %c0_i32, %c0_i32_0 : i32, i32, i32
  }
  func.func @transform_3(%arg0: i32, %arg1: i32) -> (i32, i32, i32) {
    %c0_i32 = arith.constant 0 : i32
    %c0_i32_0 = arith.constant 0 : i32
    %c0_i32_1 = arith.constant 0 : i32
    return %arg0, %c0_i32, %c0_i32_0 : i32, i32, i32
  }
}

</mosaic_0001>

<llo_original>
// kernel: tpu_custom_call.1
$region0: #{tpu_custom_call.1}
  #allocation0 [shape = 'u32[]', space=smem, size = 0x4, offset = 0x4, fixed_abs, tag = 'smem constant byte address 0x4 - core index']
  #allocation1 [shape = 'u32[144,128]{1,0:T(1,128)}', space=vmem, size = 0x12000, scoped, tag = 'internal scratch']
  %s0 = inlined_call_operand.hbm [shape: f32[20,128], index: 0, kind: input, shape index: {}]
  %s1 = inlined_call_operand.hbm [shape: f32[20,128], index: 1, kind: input, shape index: {}]
  %s2 = inlined_call_operand.hbm [shape: f32[1,128,128], index: 2, kind: output, shape index: {0}]
  %s3 = inlined_call_operand.hbm [shape: f32[1,4,128], index: 3, kind: output, shape index: {1}]
  %4 = xla_tuple %s2, %s3
  %s5 = sld [smem:[#allocation0]]
  $region38: #{tpu_custom_call.1} parent=0
    _
  %s7 = ssub.s32 1, %s5
  %s8 = scalar_select 0, %s7, %s5
  $region1: #{tpu_custom_call.1} parent=0
    #allocation2 [shape = 'u8[12288]{0}', space=vmem, size = 0x3000, scoped, tag = 'input window, operand 0, single buffered']
    #allocation3 [shape = 's32[1]{0}', space=sflag, size = 0x4, scoped, tag = 'scoped memory for tpu_custom_call.1']
    #allocation4 [shape = 's32[1]{0}', space=sflag, size = 0x4, scoped, tag = 'scoped memory for tpu_custom_call.1']
    #allocation5 [shape = 'u8[12288]{0}', space=vmem, size = 0x3000, scoped, tag = 'input window, operand 1, single buffered']
    #allocation6 [shape = 's32[1]{0}', space=sflag, size = 0x4, scoped, tag = 'scoped memory for tpu_custom_call.1']
    #allocation7 [shape = 'u8[65536]{0}', space=vmem, size = 0x10000, scoped, tag = 'output window, operand 0, single buffered']
    #allocation8 [shape = 'u8[2048]{0}', space=vmem, size = 0x800, scoped, tag = 'output window, operand 1, single buffered']
    #allocation9 [shape = 's32[1]{0}', space=sflag, size = 0x4, scoped, tag = 'scoped memory for tpu_custom_call.1']
    %9 = vsyncpa [#allocation3], 0
    %10 = vsyncpa [#allocation6], 0
    %11 = vsyncpa [#allocation4], 0
    %12 = vsyncpa [#allocation9], 0
    // Predicated region
    $region2: #{tpu_custom_call.1} parent=1 // pred_check
      _
    $region3: #{tpu_custom_call.1} parent=1 // pred_check_branch
      %14 = sbr.rel (0) target = $region5
    $region4: #{tpu_custom_call.1} parent=1 // pred_region
      %s15 = sadd.s32 0, 0
      %p16 = scmp.lt.s32.totalorder %s15, 0
      %s17 = scalar_select %p16, %s15, 0
      %s18 = smul.u32 3, %s17
      %s20 = ssub.s32 384, 384
      %21 = vsyncadd [#allocation3], %s20
      %s22 = smul.addr %s18, 128
      %s23 = scalar_lea.hbm %s0, %s22
      %s24 = sshll.u32 [#allocation2], 4
      %s25 = int_to_ptr.vmem [resolvable:$true] %s24
      %30 = dma.hbm_to_vmem [thread:$0]  %s23, 384, %s25, [#allocation3], 128, 128, 8
    $region5: #{tpu_custom_call.1} parent=1 // pred_fallthru
      _
    // Predicated region
    $region6: #{tpu_custom_call.1} parent=1 // pred_check
      _
    $region7: #{tpu_custom_call.1} parent=1 // pred_check_branch
      %32 = sbr.rel (0) target = $region9
    $region8: #{tpu_custom_call.1} parent=1 // pred_region
      %s33 = sadd.s32 0, 0
      %p34 = scmp.lt.s32.totalorder %s33, 0
      %s35 = scalar_select %p34, %s33, 0
      %s36 = smul.u32 3, %s35
      %s38 = ssub.s32 384, 384
      %39 = vsyncadd [#allocation6], %s38
      %s40 = smul.addr %s36, 128
      %s41 = scalar_lea.hbm %s1, %s40
      %s42 = sshll.u32 [#allocation5], 4
      %s43 = int_to_ptr.vmem [resolvable:$true] %s42
      %48 = dma.hbm_to_vmem [thread:$0]  %s41, 384, %s43, [#allocation6], 128, 128, 8
    $region9: #{tpu_custom_call.1} parent=1 // pred_fallthru
      _
    // Predicated region
    $region10: #{tpu_custom_call.1} parent=1 // pred_check
      _
    $region11: #{tpu_custom_call.1} parent=1 // pred_check_branch
      %50 = sbr.rel (0) target = $region13
    $region12: #{tpu_custom_call.1} parent=1 // pred_region
      %51 = dma.done [#allocation3], 384
    $region13: #{tpu_custom_call.1} parent=1 // pred_fallthru
      _
    // Predicated region
    $region14: #{tpu_custom_call.1} parent=1 // pred_check
      _
    $region15: #{tpu_custom_call.1} parent=1 // pred_check_branch
      %53 = sbr.rel (0) target = $region17
    $region16: #{tpu_custom_call.1} parent=1 // pred_region
      %54 = dma.done [#allocation6], 384
    $region17: #{tpu_custom_call.1} parent=1 // pred_fallthru
      _
    %s55 = sadd.s32 0, 0
    %p56 = scmp.lt.s32.totalorder %s55, 0
    %s57 = scalar_select %p56, %s55, 0
    %s58 = smul.u32 3, %s57
    %s59 = sadd.s32 0, 0
    %p60 = scmp.lt.s32.totalorder %s59, 0
    %s61 = scalar_select %p60, %s59, 0
    %s62 = smul.u32 3, %s61
    %p63 = scmp.eq.s32.totalorder 0, 0
    // Predicated region
    $region18: #{tpu_custom_call.1} parent=1 // pred_check
      %p64 = pneg %p63
    $region19: #{tpu_custom_call.1} parent=1 // pred_check_branch
      %66 = sbr.rel (%p64) target = $region21
    $region20: #{tpu_custom_call.1} parent=1 // pred_region
      %67 = vst [vmem:[#allocation7] sm:$0xff] 0.0
      %68 = vst [vmem:[#allocation7 + $0x8] sm:$0xff] 0.0
      %69 = vst [vmem:[#allocation7 + $0x10] sm:$0xff] 0.0
      %70 = vst [vmem:[#allocation7 + $0x18] sm:$0xff] 0.0
      %71 = vst [vmem:[#allocation7 + $0x20] sm:$0xff] 0.0
      %72 = vst [vmem:[#allocation7 + $0x28] sm:$0xff] 0.0
      %73 = vst [vmem:[#allocation7 + $0x30] sm:$0xff] 0.0
      %74 = vst [vmem:[#allocation7 + $0x38] sm:$0xff] 0.0
      %75 = vst [vmem:[#allocation7 + $0x40] sm:$0xff] 0.0
      %76 = vst [vmem:[#allocation7 + $0x48] sm:$0xff] 0.0
      %77 = vst [vmem:[#allocation7 + $0x50] sm:$0xff] 0.0
      %78 = vst [vmem:[#allocation7 + $0x58] sm:$0xff] 0.0
      %79 = vst [vmem:[#allocation7 + $0x60] sm:$0xff] 0.0
      %80 = vst [vmem:[#allocation7 + $0x68] sm:$0xff] 0.0
      %81 = vst [vmem:[#allocation7 + $0x70] sm:$0xff] 0.0
      %82 = vst [vmem:[#allocation7 + $0x78] sm:$0xff] 0.0
      %83 = vst [vmem:[#allocation8] sm:$0xf] 0.0
    $region21: #{tpu_custom_call.1} parent=1 // pred_fallthru
      _
    %s84 = sadd.s32 0, 0
    %s85 = smul.u32 %s84, 20
    %v86 = vlaneseq
    %v87 = vshrl.u32 %v86, 7
    %v88 = vadd.s32 %v87, 8
    %v89 = vadd.s32 %v87, 16
    %v90 = vstv %s85
    %v91 = vadd.s32 %v90, %v87
    %v92 = vadd.s32 %v90, %v88
    %v93 = vadd.s32 %v90, %v89
    %vm94 = vcmp.lt.s32.totalorder %v91, 20
    %vm95 = vcmp.lt.s32.totalorder %v92, 20
    %vm96 = vcmp.lt.s32.totalorder %v93, 20
    %v97 = vld [vmem:[#allocation2] sm:$0xff]
    %v98 = vld [vmem:[#allocation2 + $0x8] sm:$0xff]
    %v99 = vld [vmem:[#allocation2 + $0x10] sm:$0xf]
    %v100 = vsel %vm94, 1, 0
    %v101 = vsel %vm95, 1, 0
    %v102 = vsel %vm96, 1, 0
    %vm103 = vcmp.eq.s32.totalorder %v100, 1
    %vm104 = vcmp.eq.s32.totalorder %v101, 1
    %vm105 = vcmp.eq.s32.totalorder %v102, 1
    %v106 = vsel %vm103, %v97, 0.0
    %v107 = vsel %vm104, %v98, 0.0
    %v108 = vsel %vm105, %v99, 0.0
    %v109 = vld [vmem:[#allocation5] sm:$0xff]
    %v110 = vld [vmem:[#allocation5 + $0x8] sm:$0xff]
    %v111 = vld [vmem:[#allocation5 + $0x10] sm:$0xf]
    %v112 = vsel %vm103, %v109, 0.0
    %v113 = vsel %vm104, %v110, 0.0
    %v114 = vsel %vm105, %v111, 0.0
    %v115 = vld [vmem:[#allocation7] sm:$0xff]
    %v116 = vld [vmem:[#allocation7 + $0x8] sm:$0xff]
    %v117 = vld [vmem:[#allocation7 + $0x10] sm:$0xff]
    %v118 = vld [vmem:[#allocation7 + $0x18] sm:$0xff]
    %v119 = vld [vmem:[#allocation7 + $0x20] sm:$0xff]
    %v120 = vld [vmem:[#allocation7 + $0x28] sm:$0xff]
    %v121 = vld [vmem:[#allocation7 + $0x30] sm:$0xff]
    %v122 = vld [vmem:[#allocation7 + $0x38] sm:$0xff]
    %v123 = vld [vmem:[#allocation7 + $0x40] sm:$0xff]
    %v124 = vld [vmem:[#allocation7 + $0x48] sm:$0xff]
    %v125 = vld [vmem:[#allocation7 + $0x50] sm:$0xff]
    %v126 = vld [vmem:[#allocation7 + $0x58] sm:$0xff]
    %v127 = vld [vmem:[#allocation7 + $0x60] sm:$0xff]
    %v128 = vld [vmem:[#allocation7 + $0x68] sm:$0xff]
    %v129 = vld [vmem:[#allocation7 + $0x70] sm:$0xff]
    %v130 = vld [vmem:[#allocation7 + $0x78] sm:$0xff]
    %131 = vxpose.xlu0.b32.start [1/16] %v106, 128
    %132 = vxpose.xlu0.b32.cont [2/16] %v107, 128
    %133 = vxpose.xlu0.b32.cont [3/16] %v108, 128
    %134 = vxpose.xlu0.b32.cont [4/16] 0.0, 128
    %135 = vxpose.xlu0.b32.cont [5/16] 0.0, 128
    %136 = vxpose.xlu0.b32.cont [6/16] 0.0, 128
    %137 = vxpose.xlu0.b32.cont [7/16] 0.0, 128
    %138 = vxpose.xlu0.b32.cont [8/16] 0.0, 128
    %139 = vxpose.xlu0.b32.cont [9/16] 0.0, 128
    %140 = vxpose.xlu0.b32.cont [10/16] 0.0, 128
    %141 = vxpose.xlu0.b32.cont [11/16] 0.0, 128
    %142 = vxpose.xlu0.b32.cont [12/16] 0.0, 128
    %143 = vxpose.xlu0.b32.cont [13/16] 0.0, 128
    %144 = vxpose.xlu0.b32.cont [14/16] 0.0, 128
    %145 = vxpose.xlu0.b32.cont [15/16] 0.0, 128
    %146 = vxpose.xlu0.b32.end [16/16] 0.0, 128
    %v147 = vpop.trf.xlu0
    %v148 = vpop.trf.xlu0
    %v149 = vpop.trf.xlu0
    %v150 = vpop.trf.xlu0
    %v151 = vpop.trf.xlu0
    %v152 = vpop.trf.xlu0
    %v153 = vpop.trf.xlu0
    %v154 = vpop.trf.xlu0
    %v155 = vpop.trf.xlu0
    %v156 = vpop.trf.xlu0
    %v157 = vpop.trf.xlu0
    %v158 = vpop.trf.xlu0
    %v159 = vpop.trf.xlu0
    %v160 = vpop.trf.xlu0
    %v161 = vpop.trf.xlu0
    %v162 = vpop.trf.xlu0
    %vm163 = vcmask 162816
    %v165 = vsel %vm163, %v147, 0
    %v168 = vsel %vm163, %v148, 0
    %v171 = vsel %vm163, %v149, 0
    %v174 = vsel %vm163, %v150, 0
    %v177 = vsel %vm163, %v151, 0
    %v180 = vsel %vm163, %v152, 0
    %v183 = vsel %vm163, %v153, 0
    %v186 = vsel %vm163, %v154, 0
    %v189 = vsel %vm163, %v155, 0
    %v192 = vsel %vm163, %v156, 0
    %v195 = vsel %vm163, %v157, 0
    %v198 = vsel %vm163, %v158, 0
    %v201 = vsel %vm163, %v159, 0
    %v204 = vsel %vm163, %v160, 0
    %v207 = vsel %vm163, %v161, 0
    %v210 = vsel %vm163, %v162, 0
    %vm212 = vcmask 1043456
    %v214 = vsel %vm212, %v114, 0
    %216 = vmatprep.subr.mxu0 0.0
    %217 = vmatpush1.msra.mxu0 %v112
    %218 = vmatprep.subr.mxu0 0.0
    %219 = vmatpush1.msra.mxu0 %v113
    %220 = vmatprep.subr.mxu0 0.0
    %221 = vmatpush1.msra.mxu0 %v214
    %222 = vmatprep.subr.mxu0 0.0
    %223 = vmatpush1.msra.mxu0 0.0
    %224 = vmatprep.subr.mxu0 0.0
    %225 = vmatpush1.msra.mxu0 0.0
    %226 = vmatprep.subr.mxu0 0.0
    %227 = vmatpush1.msra.mxu0 0.0
    %228 = vmatprep.subr.mxu0 0.0
    %229 = vmatpush1.msra.mxu0 0.0
    %230 = vmatprep.subr.mxu0 0.0
    %231 = vmatpush1.msra.mxu0 0.0
    %232 = vmatprep.subr.mxu0 0.0
    %233 = vmatpush1.msra.mxu0 0.0
    %234 = vmatprep.subr.mxu0 0.0
    %235 = vmatpush1.msra.mxu0 0.0
    %236 = vmatprep.subr.mxu0 0.0
    %237 = vmatpush1.msra.mxu0 0.0
    %238 = vmatprep.subr.mxu0 0.0
    %239 = vmatpush1.msra.mxu0 0.0
    %240 = vmatprep.subr.mxu0 0.0
    %241 = vmatpush1.msra.mxu0 0.0
    %242 = vmatprep.subr.mxu0 0.0
    %243 = vmatpush1.msra.mxu0 0.0
    %244 = vmatprep.subr.mxu0 0.0
    %245 = vmatpush1.msra.mxu0 0.0
    %246 = vmatprep.subr.mxu0 0.0
    %247 = vmatpush1.msra.mxu0 0.0
    %248 = vmatprep.subr.mxu0 0.0
    %249 = vmatpush1.msra.mxu0 0.0
    %250 = vmatprep.subr.mxu0 0.0
    %251 = vmatpush1.msra.mxu0 0.0
    %252 = vmatprep.subr.mxu0 0.0
    %253 = vmatpush1.msra.mxu0 0.0
    %254 = vmatprep.subr.mxu0 0.0
    %255 = vmatpush1.msra.mxu0 0.0
    %256 = vmatprep.subr.mxu0 0.0
    %257 = vmatpush1.msra.mxu0 0.0
    %258 = vmatprep.subr.mxu0 0.0
    %259 = vmatpush1.msra.mxu0 0.0
    %260 = vmatprep.subr.mxu0 0.0
    %261 = vmatpush1.msra.mxu0 0.0
    %262 = vmatprep.subr.mxu0 0.0
    %263 = vmatpush1.msra.mxu0 0.0
    %264 = vmatprep.subr.mxu0 0.0
    %265 = vmatpush1.msra.mxu0 0.0
    %266 = vmatprep.subr.mxu0 0.0
    %267 = vmatpush1.msra.mxu0 0.0
    %268 = vmatprep.subr.mxu0 0.0
    %269 = vmatpush1.msra.mxu0 0.0
    %270 = vmatprep.subr.mxu0 0.0
    %271 = vmatpush1.msra.mxu0 0.0
    %272 = vmatprep.subr.mxu0 0.0
    %273 = vmatpush1.msra.mxu0 0.0
    %274 = vmatprep.subr.mxu0 0.0
    %275 = vmatpush1.msra.mxu0 0.0
    %276 = vmatprep.subr.mxu0 0.0
    %277 = vmatpush1.msra.mxu0 0.0
    %278 = vmatprep.subr.mxu0 0.0
    %279 = vmatpush1.msra.mxu0 0.0
    %280 = vmatprep.mubr.f32.mxu0 0.0
    %281 = vmatmul.mubr.f32.gmra.mrb[0].mxu0 %v165
    %v282 = vpop.f32.mrb[0].mxu0
    %v283 = vadd.f32 0.0, %v282
    %v284 = vpop.f32.mrb[0].mxu0
    %285 = vmatprep.mubr.f32.mxu0 0.0
    %286 = vmatmul.mubr.f32.gmra.mrb[0].mxu0 %v168
    %v287 = vpop.f32.mrb[0].mxu0
    %v288 = vadd.f32 0.0, %v287
    %v289 = vpop.f32.mrb[0].mxu0
    %290 = vmatprep.mubr.f32.mxu0 0.0
    %291 = vmatmul.mubr.f32.gmra.mrb[0].mxu0 %v171
    %v292 = vpop.f32.mrb[0].mxu0
    %v293 = vadd.f32 0.0, %v292
    %v294 = vpop.f32.mrb[0].mxu0
    %295 = vmatprep.mubr.f32.mxu0 0.0
    %296 = vmatmul.mubr.f32.gmra.mrb[0].mxu0 %v174
    %v297 = vpop.f32.mrb[0].mxu0
    %v298 = vadd.f32 0.0, %v297
    %v299 = vpop.f32.mrb[0].mxu0
    %300 = vmatprep.mubr.f32.mxu0 0.0
    %301 = vmatmul.mubr.f32.gmra.mrb[0].mxu0 %v177
    %v302 = vpop.f32.mrb[0].mxu0
    %v303 = vadd.f32 0.0, %v302
    %v304 = vpop.f32.mrb[0].mxu0
    %305 = vmatprep.mubr.f32.mxu0 0.0
    %306 = vmatmul.mubr.f32.gmra.mrb[0].mxu0 %v180
    %v307 = vpop.f32.mrb[0].mxu0
    %v308 = vadd.f32 0.0, %v307
    %v309 = vpop.f32.mrb[0].mxu0
    %310 = vmatprep.mubr.f32.mxu0 0.0
    %311 = vmatmul.mubr.f32.gmra.mrb[0].mxu0 %v183
    %v312 = vpop.f32.mrb[0].mxu0
    %v313 = vadd.f32 0.0, %v312
    %v314 = vpop.f32.mrb[0].mxu0
    %315 = vmatprep.mubr.f32.mxu0 0.0
    %316 = vmatmul.mubr.f32.gmra.mrb[0].mxu0 %v186
    %v317 = vpop.f32.mrb[0].mxu0
    %v318 = vadd.f32 0.0, %v317
    %v319 = vpop.f32.mrb[0].mxu0
    %320 = vmatprep.mubr.f32.mxu0 0.0
    %321 = vmatmul.mubr.f32.gmra.mrb[0].mxu0 %v189
    %v322 = vpop.f32.mrb[0].mxu0
    %v323 = vadd.f32 0.0, %v322
    %v324 = vpop.f32.mrb[0].mxu0
    %325 = vmatprep.mubr.f32.mxu0 0.0
    %326 = vmatmul.mubr.f32.gmra.mrb[0].mxu0 %v192
    %v327 = vpop.f32.mrb[0].mxu0
    %v328 = vadd.f32 0.0, %v327
    %v329 = vpop.f32.mrb[0].mxu0
    %330 = vmatprep.mubr.f32.mxu0 0.0
    %331 = vmatmul.mubr.f32.gmra.mrb[0].mxu0 %v195
    %v332 = vpop.f32.mrb[0].mxu0
    %v333 = vadd.f32 0.0, %v332
    %v334 = vpop.f32.mrb[0].mxu0
    %335 = vmatprep.mubr.f32.mxu0 0.0
    %336 = vmatmul.mubr.f32.gmra.mrb[0].mxu0 %v198
    %v337 = vpop.f32.mrb[0].mxu0
    %v338 = vadd.f32 0.0, %v337
    %v339 = vpop.f32.mrb[0].mxu0
    %340 = vmatprep.mubr.f32.mxu0 0.0
    %341 = vmatmul.mubr.f32.gmra.mrb[0].mxu0 %v201
    %v342 = vpop.f32.mrb[0].mxu0
    %v343 = vadd.f32 0.0, %v342
    %v344 = vpop.f32.mrb[0].mxu0
    %345 = vmatprep.mubr.f32.mxu0 0.0
    %346 = vmatmul.mubr.f32.gmra.mrb[0].mxu0 %v204
    %v347 = vpop.f32.mrb[0].mxu0
    %v348 = vadd.f32 0.0, %v347
    %v349 = vpop.f32.mrb[0].mxu0
    %350 = vmatprep.mubr.f32.mxu0 0.0
    %351 = vmatmul.mubr.f32.gmra.mrb[0].mxu0 %v207
    %v352 = vpop.f32.mrb[0].mxu0
    %v353 = vadd.f32 0.0, %v352
    %v354 = vpop.f32.mrb[0].mxu0
    %355 = vmatprep.mubr.f32.mxu0 0.0
    %356 = vmatmul.mubr.f32.gmra.mrb[0].mxu0 %v210
    %v357 = vpop.f32.mrb[0].mxu0
    %v358 = vadd.f32 0.0, %v357
    %v359 = vpop.f32.mrb[0].mxu0
    %360 = vdwg.mxu0
    %v361 = vadd.f32 %v115, %v283
    %v362 = vadd.f32 %v116, %v288
    %v363 = vadd.f32 %v117, %v293
    %v364 = vadd.f32 %v118, %v298
    %v365 = vadd.f32 %v119, %v303
    %v366 = vadd.f32 %v120, %v308
    %v367 = vadd.f32 %v121, %v313
    %v368 = vadd.f32 %v122, %v318
    %v369 = vadd.f32 %v123, %v323
    %v370 = vadd.f32 %v124, %v328
    %v371 = vadd.f32 %v125, %v333
    %v372 = vadd.f32 %v126, %v338
    %v373 = vadd.f32 %v127, %v343
    %v374 = vadd.f32 %v128, %v348
    %v375 = vadd.f32 %v129, %v353
    %v376 = vadd.f32 %v130, %v358
    %377 = vst [vmem:[#allocation7] sm:$0xff] %v361
    %378 = vst [vmem:[#allocation7 + $0x8] sm:$0xff] %v362
    %379 = vst [vmem:[#allocation7 + $0x10] sm:$0xff] %v363
    %380 = vst [vmem:[#allocation7 + $0x18] sm:$0xff] %v364
    %381 = vst [vmem:[#allocation7 + $0x20] sm:$0xff] %v365
    %382 = vst [vmem:[#allocation7 + $0x28] sm:$0xff] %v366
    %383 = vst [vmem:[#allocation7 + $0x30] sm:$0xff] %v367
    %384 = vst [vmem:[#allocation7 + $0x38] sm:$0xff] %v368
    %385 = vst [vmem:[#allocation7 + $0x40] sm:$0xff] %v369
    %386 = vst [vmem:[#allocation7 + $0x48] sm:$0xff] %v370
    %387 = vst [vmem:[#allocation7 + $0x50] sm:$0xff] %v371
    %388 = vst [vmem:[#allocation7 + $0x58] sm:$0xff] %v372
    %389 = vst [vmem:[#allocation7 + $0x60] sm:$0xff] %v373
    %390 = vst [vmem:[#allocation7 + $0x68] sm:$0xff] %v374
    %391 = vst [vmem:[#allocation7 + $0x70] sm:$0xff] %v375
    %392 = vst [vmem:[#allocation7 + $0x78] sm:$0xff] %v376
    %v393 = vadd.f32 %v106, %v107
    %v394 = vsel %vm212, %v108, 0.0
    %v395 = vadd.f32 %v393, %v394
    %v396 = vrot.slane %v395, 4
    %v397 = vadd.f32 %v395, %v396
    %v398 = vrot.slane %v397, 2
    %v399 = vadd.f32 %v397, %v398
    %v400 = vrot.slane %v399, 1
    %v401 = vadd.f32 %v399, %v400
    %v402 = vadd.f32 %v112, %v113
    %v403 = vsel %vm212, %v114, 0.0
    %v404 = vadd.f32 %v402, %v403
    %v405 = vrot.slane %v404, 4
    %v406 = vadd.f32 %v404, %v405
    %v407 = vrot.slane %v406, 2
    %v408 = vadd.f32 %v406, %v407
    %v409 = vrot.slane %v408, 1
    %v410 = vadd.f32 %v408, %v409
    %v411 = vmul.f32 %v106, %v106
    %v412 = vmul.f32 %v107, %v107
    %v413 = vmul.f32 %v108, %v108
    %v414 = vadd.f32 %v411, %v412
    %v415 = vsel %vm212, %v413, 0.0
    %v416 = vadd.f32 %v414, %v415
    %v417 = vrot.slane %v416, 4
    %v418 = vadd.f32 %v416, %v417
    %v419 = vrot.slane %v418, 2
    %v420 = vadd.f32 %v418, %v419
    %v421 = vrot.slane %v420, 1
    %v422 = vadd.f32 %v420, %v421
    %v423 = vmul.f32 %v112, %v112
    %v424 = vmul.f32 %v113, %v113
    %v425 = vmul.f32 %v114, %v114
    %v426 = vadd.f32 %v423, %v424
    %v427 = vsel %vm212, %v425, 0.0
    %v428 = vadd.f32 %v426, %v427
    %v429 = vrot.slane %v428, 4
    %v430 = vadd.f32 %v428, %v429
    %v431 = vrot.slane %v430, 2
    %v432 = vadd.f32 %v430, %v431
    %v433 = vrot.slane %v432, 1
    %v434 = vadd.f32 %v432, %v433
    %v435 = vld [vmem:[#allocation8] sm:$0xf]
    %vm436 = vcmask 1040384
    %v437 = vsel %vm436, %v401, %v410
    %vm438 = vcmask 1041408
    %v439 = vsel %vm438, %v437, %v422
    %vm440 = vcmask 1042432
    %v441 = vsel %vm440, %v439, %v434
    %v442 = vadd.f32 %v435, %v441
    %443 = vst [vmem:[#allocation8] sm:$0xf] %v442
    // Predicated region
    $region22: #{tpu_custom_call.1} parent=1 // pred_check
      _
    $region23: #{tpu_custom_call.1} parent=1 // pred_check_branch
      %445 = sbr.rel (0) target = $region25
    $region24: #{tpu_custom_call.1} parent=1 // pred_region
      %s447 = ssub.s32 2048, 2048
      %448 = vsyncadd [#allocation4], %s447
      %s449 = sshll.u32 [#allocation7], 4
      %s450 = int_to_ptr.vmem [resolvable:$true] %s449
      %455 = dma.vmem_to_hbm [thread:$0]  %s450, 2048, %s2, [#allocation4], 128, 128, 8
    $region25: #{tpu_custom_call.1} parent=1 // pred_fallthru
      _
    // Predicated region
    $region26: #{tpu_custom_call.1} parent=1 // pred_check
      _
    $region27: #{tpu_custom_call.1} parent=1 // pred_check_branch
      %457 = sbr.rel (0) target = $region29
    $region28: #{tpu_custom_call.1} parent=1 // pred_region
      %s459 = ssub.s32 64, 64
      %460 = vsyncadd [#allocation9], %s459
      %s462 = sshll.u32 [#allocation8], 4
      %s463 = int_to_ptr.vmem [resolvable:$true] %s462
      %465 = dma.vmem_to_hbm [thread:$0]  %s463, 64, %s3, [#allocation9]
    $region29: #{tpu_custom_call.1} parent=1 // pred_fallthru
      _
    // Predicated region
    $region30: #{tpu_custom_call.1} parent=1 // pred_check
      _
    $region31: #{tpu_custom_call.1} parent=1 // pred_check_branch
      %467 = sbr.rel (0) target = $region33
    $region32: #{tpu_custom_call.1} parent=1 // pred_region
      %468 = dma.done [#allocation4], 2048
    $region33: #{tpu_custom_call.1} parent=1 // pred_fallthru
      _
    // Predicated region
    $region34: #{tpu_custom_call.1} parent=1 // pred_check
      _
    $region35: #{tpu_custom_call.1} parent=1 // pred_check_branch
      %470 = sbr.rel (0) target = $region37
    $region36: #{tpu_custom_call.1} parent=1 // pred_region
      %471 = dma.done [#allocation9], 64
    $region37: #{tpu_custom_call.1} parent=1 // pred_fallthru
      _
    %472 = vsyncpa [#allocation3], 1
    %473 = vsyncpa [#allocation6], 1
    %474 = vsyncpa [#allocation4], 1
    %475 = vsyncpa [#allocation9], 1

</llo_original>
